<compile_context>
chip_gen: v6e
topology: v6e:2x2x1
jax: 0.10.0
libtpu: 0.0.40
codegen_flags: <defaults>
</compile_context>

<pallas_src>
import functools

import jax
import jax.numpy as jnp
import numpy as np
from jax.experimental import pallas as pl
from jax.experimental.pallas import tpu as pltpu

NEG_SLOPE = 0.01  # PyTorch nn.LeakyReLU() default negative_slope


def _round_up(x, m):
    return ((x + m - 1) // m) * m


def _leaky_relu(v):
    return jnp.where(v >= 0, v, NEG_SLOPE * v)


def _hypergraph_kernel(x_ref, adj_ref, out_ref):
    # x_ref   : (TM, Np)  bf16 -- a tile of embeds_cate rows for time step t
    # adj_ref : (Hp, Np)  bf16 -- adj[t] (resident across the inner grid axis)
    # out_ref : (TM, Np)  f32
    x = x_ref[...]
    adj = adj_ref[...]

    # hyper[m, h] = sum_n adj[h, n] * x[m, n]   (contract last dim of both)
    hyper = jax.lax.dot_general(
        x, adj, (((1,), (1,)), ((), ())),
        preferred_element_type=jnp.float32)          # (TM, Hp) f32 accumulator
    hyper = _leaky_relu(hyper).astype(jnp.bfloat16)  # LeakyReLU in f32, feed MXU bf16

    # ret[m, n] = sum_h adj[h, n] * hyper[m, h]
    ret = jax.lax.dot_general(
        hyper, adj, (((1,), (0,)), ((), ())),
        preferred_element_type=jnp.float32)          # (TM, Np) f32
    out_ref[...] = _leaky_relu(ret).astype(out_ref.dtype)


@functools.partial(jax.jit, static_argnames=())
def hypergraph_forward(embeds, adj):
    """embeds: (B, D, A, T, C) float32; adj: (T, H, A*C) float32.
    Returns (B, D, A, T, C) float32, matching Hypergraph.forward."""
    B, D, A, T, C = embeds.shape
    Ta, H, N = adj.shape
    assert Ta == T and N == A * C
    BD = B * D

    # Tile the BD (row) axis; lane/sublane-pad N and H to 128.
    TM = min(256, _round_up(BD, 8))
    BDp = _round_up(BD, TM)
    Np = _round_up(N, 128)
    Hp = _round_up(H, 128)

    # Same relayout torch does with .transpose(2,3).contiguous().view(...),
    # arranged time-major so each grid step gets a lane-dense (TM, Np) slab.
    x = jnp.transpose(embeds, (3, 0, 1, 2, 4)).reshape(T, BD, N)
    x = jnp.pad(x, ((0, 0), (0, BDp - BD), (0, Np - N))).astype(jnp.bfloat16)
    adj_p = jnp.pad(adj, ((0, 0), (0, Hp - H), (0, Np - N))).astype(jnp.bfloat16)

    # Bounded per-step VMEM working set (double-buffered in/out + adj + temps).
    blk_bytes = (2 * TM * Np * 2          # x tiles (bf16, double-buffered)
                 + 2 * Hp * Np * 2        # adj tiles (bf16, double-buffered)
                 + 2 * TM * Np * 4        # out tiles (f32, double-buffered)
                 + 2 * TM * Hp * 4)       # hyper intermediate + temporaries
    vmem_limit = int(min(max(2 * blk_bytes, 16 * 1024 * 1024), 64 * 1024 * 1024))

    cost = pl.CostEstimate(
        flops=4 * T * BDp * Np * Hp,                       # two matmuls
        transcendentals=0,
        bytes_accessed=T * (BDp * Np * 2 + Hp * Np * 2 + BDp * Np * 4))

    out = pl.pallas_call(
        _hypergraph_kernel,
        out_shape=jax.ShapeDtypeStruct((T, BDp, Np), jnp.float32),
        grid=(T, BDp // TM),
        in_specs=[
            pl.BlockSpec((None, TM, Np), lambda t, m: (t, m, 0)),   # embeds_cate tile
            pl.BlockSpec((None, Hp, Np), lambda t, m: (t, 0, 0)),   # adj[t], stays resident
        ],
        out_specs=pl.BlockSpec((None, TM, Np), lambda t, m: (t, m, 0)),
        compiler_params=pltpu.CompilerParams(
            dimension_semantics=("parallel", "parallel"),
            vmem_limit_bytes=vmem_limit),
        cost_estimate=cost,
    )(x, adj_p)

    # Drop padding, then (T, B*D, N) -> (B, D, A, T, C)
    # (== retEmbeds.view(...).transpose(2, 3)).
    ret = out[:, :BD, :N].reshape(T, B, D, A, C)
    return jnp.transpose(ret, (1, 2, 3, 0, 4))


def _reference_forward(embeds, adj):
    """Pure-JAX replica of Hypergraph.forward, with the same bf16 quantization
    points as the kernel (matmul inputs + hyper intermediate) so the check is
    tight.  The only delta vs. PyTorch f32 is that bf16 MXU quantization."""
    B, D, A, T, C = embeds.shape
    _, H, N = adj.shape
    x = jnp.transpose(embeds, (0, 1, 3, 2, 4)).reshape(B, D, T, N).astype(jnp.bfloat16)
    a = adj.astype(jnp.bfloat16)
    hyper = _leaky_relu(
        jnp.einsum('thn,bdtn->bdth', a, x, preferred_element_type=jnp.float32))
    hyper = hyper.astype(jnp.bfloat16)
    ret = _leaky_relu(
        jnp.einsum('thn,bdth->bdtn', a, hyper, preferred_element_type=jnp.float32))
    ret = ret.reshape(B, D, T, A, C)
    return jnp.transpose(ret, (0, 1, 3, 2, 4))                 # (B, D, A, T, C)


if __name__ == "__main__":
    # Small shapes: batch=2, latdim=16, areaNum=8, cateNum=4, temporalRange=4,
    # hyperNum=32  ->  N = areaNum*cateNum = 32
    B, latdim, areaNum, cateNum, temporalRange, hyperNum = 2, 16, 8, 4, 4, 32
    N = areaNum * cateNum

    key = jax.random.PRNGKey(0)
    k_e, k_a = jax.random.split(key)
    embeds = jax.random.normal(
        k_e, (B, latdim, areaNum, temporalRange, cateNum), dtype=jnp.float32)
    adj = jax.random.normal(
        k_a, (temporalRange, hyperNum, N), dtype=jnp.float32)

    out = hypergraph_forward(embeds, adj)
    out = jax.block_until_ready(out)

    ref = _reference_forward(embeds, adj)
    np.testing.assert_allclose(np.asarray(out), np.asarray(ref),
                               rtol=2e-2, atol=2e-2)

    assert out.shape == (B, latdim, areaNum, temporalRange, cateNum)
    print("KERNEL_OK")
</pallas_src>

<mosaic_0001>
module attributes {stable_mosaic.version = 11 : i64} {
  func.func @_hypergraph_kernel(%arg0: i32, %arg1: i32, %arg2: memref<1x32x128xbf16, #tpu.memory_space<vmem>>, %arg3: memref<1x128x128xbf16, #tpu.memory_space<vmem>>, %arg4: memref<1x32x128xf32, #tpu.memory_space<vmem>>) attributes {dimension_semantics = [#tpu.dimension_semantics<parallel>, #tpu.dimension_semantics<parallel>], iteration_bounds = array<i64: 4, 1>, scalar_prefetch = 0 : i64, scratch_operands = 0 : i64, tpu.core_type = #tpu.core_type<tc>, window_params = [{transform_indices = @transform_0, window_bounds = array<i64: 1, 32, 128>}, {transform_indices = @transform_1, window_bounds = array<i64: 1, 128, 128>}, {transform_indices = @transform_2, window_bounds = array<i64: 1, 32, 128>}]} {
    %c0 = arith.constant 0 : index
    %c0_0 = arith.constant 0 : index
    %c0_1 = arith.constant 0 : index
    %0 = vector.load %arg2[%c0, %c0_0, %c0_1] : memref<1x32x128xbf16, #tpu.memory_space<vmem>>, vector<1x32x128xbf16>
    %1 = vector.shape_cast %0 : vector<1x32x128xbf16> to vector<32x128xbf16>
    %c0_2 = arith.constant 0 : index
    %c0_3 = arith.constant 0 : index
    %c0_4 = arith.constant 0 : index
    %2 = vector.load %arg3[%c0_2, %c0_3, %c0_4] : memref<1x128x128xbf16, #tpu.memory_space<vmem>>, vector<1x128x128xbf16>
    %3 = vector.shape_cast %2 : vector<1x128x128xbf16> to vector<128x128xbf16>
    %cst = arith.constant dense<0.000000e+00> : vector<32x128xf32>
    %4 = tpu.matmul %1, %3, %cst {dimension_numbers = #tpu.dot_dimension_numbers<[1], [1], [0], [0], [0, 0, 1, 0], [], []>} : vector<32x128xbf16>, vector<128x128xbf16>, vector<32x128xf32> -> vector<32x128xf32>
    %cst_5 = arith.constant 0.000000e+00 : f32
    %5 = vector.broadcast %cst_5 : f32 to vector<32x128xf32>
    %6 = arith.cmpf oge, %4, %5 : vector<32x128xf32>
    %cst_6 = arith.constant 0.00999999977 : f32
    %7 = vector.broadcast %cst_6 : f32 to vector<32x128xf32>
    %8 = arith.mulf %7, %4 : vector<32x128xf32>
    %9 = arith.select %6, %4, %8 : vector<32x128xi1>, vector<32x128xf32>
    %10 = arith.truncf %9 : vector<32x128xf32> to vector<32x128xbf16>
    %cst_7 = arith.constant dense<0.000000e+00> : vector<32x128xf32>
    %11 = tpu.matmul %10, %3, %cst_7 {dimension_numbers = #tpu.dot_dimension_numbers<[1], [0], [0], [1], [0, 0, 1, 1], [], []>} : vector<32x128xbf16>, vector<128x128xbf16>, vector<32x128xf32> -> vector<32x128xf32>
    %cst_8 = arith.constant 0.000000e+00 : f32
    %12 = vector.broadcast %cst_8 : f32 to vector<32x128xf32>
    %13 = arith.cmpf oge, %11, %12 : vector<32x128xf32>
    %cst_9 = arith.constant 0.00999999977 : f32
    %14 = vector.broadcast %cst_9 : f32 to vector<32x128xf32>
    %15 = arith.mulf %14, %11 : vector<32x128xf32>
    %16 = arith.select %13, %11, %15 : vector<32x128xi1>, vector<32x128xf32>
    %c0_10 = arith.constant 0 : index
    %c0_11 = arith.constant 0 : index
    %c0_12 = arith.constant 0 : index
    %17 = vector.load %arg4[%c0_10, %c0_11, %c0_12] : memref<1x32x128xf32, #tpu.memory_space<vmem>>, vector<1x32x128xf32>
    %18 = vector.shape_cast %17 : vector<1x32x128xf32> to vector<32x128xf32>
    %19 = vector.shape_cast %16 : vector<32x128xf32> to vector<1x32x128xf32>
    tpu.vector_store %arg4[%c0_10, %c0_11, %c0_12], %19 {strides = array<i32>} : memref<1x32x128xf32, #tpu.memory_space<vmem>>, vector<1x32x128xf32>,
    return
  }
  func.func @transform_0(%arg0: i32, %arg1: i32) -> (i32, i32, i32) {
    %c0_i32 = arith.constant 0 : i32
    %c0_i32_0 = arith.constant 0 : i32
    return %arg0, %arg1, %c0_i32 : i32, i32, i32
  }
  func.func @transform_1(%arg0: i32, %arg1: i32) -> (i32, i32, i32) {
    %c0_i32 = arith.constant 0 : i32
    %c0_i32_0 = arith.constant 0 : i32
    %c0_i32_1 = arith.constant 0 : i32
    return %arg0, %c0_i32, %c0_i32_0 : i32, i32, i32
  }
  func.func @transform_2(%arg0: i32, %arg1: i32) -> (i32, i32, i32) {
    %c0_i32 = arith.constant 0 : i32
    %c0_i32_0 = arith.constant 0 : i32
    return %arg0, %arg1, %c0_i32 : i32, i32, i32
  }
}

</mosaic_0001>

<llo_original>
// kernel: hypergraph_forward.1
$region0: #{hypergraph_forward.1}
  #allocation0 [shape = 'u32[]', space=smem, size = 0x4, offset = 0x4, fixed_abs, tag = 'smem constant byte address 0x4 - core index']
  #allocation1 [shape = 'u32[144,128]{1,0:T(1,128)}', space=vmem, size = 0x12000, scoped, tag = 'internal scratch']
  %s0 = inlined_call_operand.vmem [shape: bf16[4,32,128], index: 0, kind: input, shape index: {}]
  %s1 = inlined_call_operand.vmem [shape: bf16[4,128,128], index: 1, kind: input, shape index: {}]
  %s2 = inlined_call_operand.vmem [shape: f32[4,32,128], index: 2, kind: output, shape index: {}]
  %s3 = sld [smem:[#allocation0]]
  $region41: #{hypergraph_forward.1} parent=0
    _
  %s5 = ssub.s32 1, %s3
  %s6 = scalar_select 0, %s5, %s3
  loop: start=0, step=1, limit=6
  $region2: #{hypergraph_forward.1} parent=0 // loop_pre_header
    _
  $region3: #{hypergraph_forward.1} parent=0 // loop_header
    %s8 = sphi 0, %s12
    %p9 = scmp.ge.s32.totalorder %s8, 6
    %s15 = sphi 0, %s27
    %s16 = sphi 0, %s23
    %s17 = sphi 0, %s15
    %s18 = sphi 0, %s16
    %s19 = sphi 0, %s17
    %s20 = sphi 0, %s18
    %s32 = sphi 0, %s34
    %s35 = sphi 0, %s32
    %s36 = sphi 0, %s35
    %s52 = sphi 0, %s36
    %s58 = sphi 0, %s60
    %s61 = sphi 0, %s58
    %s62 = sphi 0, %s61
    %s78 = sphi 0, %s62
    %s86 = sphi 0, %s88
    %s89 = sphi 0, %s86
    %s90 = sphi 0, %s89
    %s106 = sphi 0, %s90
  $region4: #{hypergraph_forward.1} parent=0 // loop_header_branch
    %11 = sbr.rel (%p9) target = $region8
  $region5: #{hypergraph_forward.1} parent=0 // loop_body
    %s13 = ssub.s32 %s8, 1
    %s14 = ssub.s32 %s8, 2
    %s21 = sadd.s32 1, %s16
    %p22 = scmp.ge.s32.totalorder %s21, 1
    %s23 = scalar_select %p22, 0, %s21
    %s24 = sadd.s32 1, %s15
    %s25 = scalar_select %p22, %s24, %s15
    %p26 = scmp.ge.s32.totalorder %s25, 4
    %s27 = scalar_select %p26, 0, %s25
    %s28 = ssub.s32 %s15, %s27
    %s29 = ssub.s32 %s16, %s23
    %s30 = sor.u32 %s28, %s29
    %p31 = scmp.eq.s32.totalorder %s30, 0
    %s33 = sadd.s32 %s32, 1
    %s34 = scalar_select %p31, %s32, %s33
    %p37 = pneg %p31
    %p38 = scmp.eq.s32.totalorder %s8, 3
    %p39 = por %p37, %p38
    %p40 = scmp.ne.s32.totalorder %s32, %s35
    %p41 = scmp.eq.s32.totalorder %s8, 0
    %p42 = por %p40, %p41
    %p43 = scmp.ne.s32.totalorder %s32, %s35
    %p44 = scmp.eq.s32.totalorder %s13, 3
    %p45 = por %p43, %p44
    %p46 = scmp.ne.s32.totalorder %s35, %s36
    %p47 = scmp.eq.s32.totalorder %s13, 0
    %p48 = por %p46, %p47
    %p49 = scmp.ne.s32.totalorder %s35, %s36
    %p50 = scmp.eq.s32.totalorder %s14, 3
    %p51 = por %p49, %p50
    %p53 = scmp.ne.s32.totalorder %s36, %s52
    %p54 = scmp.eq.s32.totalorder %s14, 0
    %p55 = por %p53, %p54
    %s56 = ssub.s32 %s15, %s27
    %p57 = scmp.eq.s32.totalorder %s56, 0
    %s59 = sadd.s32 %s58, 1
    %s60 = scalar_select %p57, %s58, %s59
    %p63 = pneg %p57
    %p64 = scmp.eq.s32.totalorder %s8, 3
    %p65 = por %p63, %p64
    %p66 = scmp.ne.s32.totalorder %s58, %s61
    %p67 = scmp.eq.s32.totalorder %s8, 0
    %p68 = por %p66, %p67
    %p69 = scmp.ne.s32.totalorder %s58, %s61
    %p70 = scmp.eq.s32.totalorder %s13, 3
    %p71 = por %p69, %p70
    %p72 = scmp.ne.s32.totalorder %s61, %s62
    %p73 = scmp.eq.s32.totalorder %s13, 0
    %p74 = por %p72, %p73
    %p75 = scmp.ne.s32.totalorder %s61, %s62
    %p76 = scmp.eq.s32.totalorder %s14, 3
    %p77 = por %p75, %p76
    %p79 = scmp.ne.s32.totalorder %s62, %s78
    %p80 = scmp.eq.s32.totalorder %s14, 0
    %p81 = por %p79, %p80
    %s82 = ssub.s32 %s15, %s27
    %s83 = ssub.s32 %s16, %s23
    %s84 = sor.u32 %s82, %s83
    %p85 = scmp.eq.s32.totalorder %s84, 0
    %s87 = sadd.s32 %s86, 1
    %s88 = scalar_select %p85, %s86, %s87
    %p91 = pneg %p85
    %p92 = scmp.eq.s32.totalorder %s8, 3
    %p93 = por %p91, %p92
    %p94 = scmp.ne.s32.totalorder %s86, %s89
    %p95 = scmp.eq.s32.totalorder %s8, 0
    %p96 = por %p94, %p95
    %p97 = scmp.ne.s32.totalorder %s86, %s89
    %p98 = scmp.eq.s32.totalorder %s13, 3
    %p99 = por %p97, %p98
    %p100 = scmp.ne.s32.totalorder %s89, %s90
    %p101 = scmp.eq.s32.totalorder %s13, 0
    %p102 = por %p100, %p101
    %p103 = scmp.ne.s32.totalorder %s89, %s90
    %p104 = scmp.eq.s32.totalorder %s14, 3
    %p105 = por %p103, %p104
    %p107 = scmp.ne.s32.totalorder %s90, %s106
    %p108 = scmp.eq.s32.totalorder %s14, 0
    %p109 = por %p107, %p108
    %p110 = scmp.le.s32.totalorder 1, %s8
    %p111 = scmp.lt.s32.totalorder %s8, 5
    %p112 = pnand %p110, %p111
    %p113 = pneg %p112
    // Predicated region
    $region9: #{hypergraph_forward.1} parent=5 // pred_check
      _
    $region10: #{hypergraph_forward.1} parent=5 // pred_check_branch
      %115 = sbr.rel (%p112) target = $region12
    $region11: #{hypergraph_forward.1} parent=5 // pred_region
      %s116 = ssub.s32 %s8, 1
    $region12: #{hypergraph_forward.1} parent=5 // pred_fallthru
      _
    %p117 = scmp.lt.s32.totalorder %s8, 4
    // Predicated region
    $region13: #{hypergraph_forward.1} parent=5 // pred_check
      %p118 = pneg %p117
    $region14: #{hypergraph_forward.1} parent=5 // pred_check_branch
      %120 = sbr.rel (%p118) target = $region16
    $region15: #{hypergraph_forward.1} parent=5 // pred_region
      // Predicated region
      $region17: #{hypergraph_forward.1} parent=15 // pred_check
        %p121 = pneg %p42
      $region18: #{hypergraph_forward.1} parent=15 // pred_check_branch
        %123 = sbr.rel (%p121) target = $region20
      $region19: #{hypergraph_forward.1} parent=15 // pred_region
        %s124 = smul.u32 4, %s16
        %p125 = scmp.lt.s32.totalorder %s15, 3
        %s126 = scalar_select %p125, %s15, 3
        %p127 = scmp.lt.s32.totalorder %s124, 3
        %s128 = scalar_select %p127, %s124, 3
        %s129 = smul.addr %s126, 4
        %s130 = sadd.s32 %s128, %s129
        %s131 = smul.addr %s130, 4
        %s132 = scalar_lea.vmem %s0, %s131
        %s133 = smul.u32 4, %s16
      $region20: #{hypergraph_forward.1} parent=15 // pred_fallthru
        _
      // Predicated region
      $region21: #{hypergraph_forward.1} parent=15 // pred_check
        %p134 = pneg %p68
      $region22: #{hypergraph_forward.1} parent=15 // pred_check_branch
        %136 = sbr.rel (%p134) target = $region24
      $region23: #{hypergraph_forward.1} parent=15 // pred_region
        %p137 = scmp.lt.s32.totalorder %s15, 3
        %s138 = scalar_select %p137, %s15, 3
        %s139 = smul.addr %s138, 16
        %s140 = smul.addr %s139, 4
        %s141 = scalar_lea.vmem %s1, %s140
      $region24: #{hypergraph_forward.1} parent=15 // pred_fallthru
        _
    $region16: #{hypergraph_forward.1} parent=5 // pred_fallthru
      _
    %p142 = scmp.le.s32.totalorder 1, %s8
    %p143 = scmp.lt.s32.totalorder %s8, 5
    %p144 = pnand %p142, %p143
    %p145 = pneg %p144
    // Predicated region
    $region25: #{hypergraph_forward.1} parent=5 // pred_check
      _
    $region26: #{hypergraph_forward.1} parent=5 // pred_check_branch
      %147 = sbr.rel (%p144) target = $region28
    $region27: #{hypergraph_forward.1} parent=5 // pred_region
      %s148 = ssub.s32 %s8, 1
      %s149 = smul.u32 4, %s18
      %p150 = scmp.lt.s32.totalorder %s17, 3
      %s151 = scalar_select %p150, %s17, 3
      %p152 = scmp.lt.s32.totalorder %s149, 3
      %s153 = scalar_select %p152, %s149, 3
      %s154 = smul.addr %s151, 4
      %s155 = sadd.s32 %s153, %s154
      %s156 = smul.addr %s155, 4
      %s157 = scalar_lea.vmem %s0, %s156
      %p158 = pneg %p48
      %p159 = pneg %p45
      %p160 = scmp.lt.s32.totalorder %s17, 3
      %s161 = scalar_select %p160, %s17, 3
      %s162 = smul.addr %s161, 16
      %s163 = smul.addr %s162, 4
      %s164 = scalar_lea.vmem %s1, %s163
      %p165 = pneg %p74
      %p166 = pneg %p71
      %p167 = pneg %p102
      %p168 = pneg %p99
      %s169 = smul.u32 4, %s18
      %p170 = scmp.lt.s32.totalorder %s17, 3
      %s171 = scalar_select %p170, %s17, 3
      %p172 = scmp.lt.s32.totalorder %s169, 3
      %s173 = scalar_select %p172, %s169, 3
      %s174 = smul.addr %s171, 4
      %s175 = sadd.s32 %s173, %s174
      %s176 = smul.addr %s175, 8
      %s177 = scalar_lea.vmem %s2, %s176
      %s178 = smul.u32 4, %s18
      %p179 = scmp.lt.s32.totalorder %s17, 3
      %s180 = scalar_select %p179, %s17, 3
      %p181 = scmp.lt.s32.totalorder %s178, 3
      %s182 = scalar_select %p181, %s178, 3
      %s183 = smul.addr %s180, 4
      %s184 = sadd.s32 %s182, %s183
      %s185 = smul.addr %s184, 4
      %s186 = scalar_lea.vmem %s0, %s185
      %s187 = smul.u32 4, %s18
      %p188 = scmp.lt.s32.totalorder %s17, 3
      %s189 = scalar_select %p188, %s17, 3
      %s190 = smul.addr %s189, 16
      %s191 = smul.addr %s190, 4
      %s192 = scalar_lea.vmem %s1, %s191
      %s193 = smul.u32 4, %s18
      %p194 = scmp.lt.s32.totalorder %s17, 3
      %s195 = scalar_select %p194, %s17, 3
      %p196 = scmp.lt.s32.totalorder %s193, 3
      %s197 = scalar_select %p196, %s193, 3
      %s198 = smul.addr %s195, 4
      %s199 = sadd.s32 %s197, %s198
      %s200 = smul.addr %s199, 8
      %s201 = scalar_lea.vmem %s2, %s200
      %s202 = smul.u32 4, %s18
      %v204 = vld [vmem:[%s186] sm:$0xf]
      %v205 = vld [vmem:[%s186 + $0x4] sm:$0xf]
      %v206 = vld [vmem:[%s186 + $0x8] sm:$0xf]
      %v207 = vld [vmem:[%s186 + $0xc] sm:$0xf]
      %v208 = vld [vmem:[%s192] sm:$0xf]
      %v209 = vld [vmem:[%s192 + $0x4] sm:$0xf]
      %v210 = vld [vmem:[%s192 + $0x8] sm:$0xf]
      %v211 = vld [vmem:[%s192 + $0xc] sm:$0xf]
      %v212 = vld [vmem:[%s192 + $0x10] sm:$0xf]
      %v213 = vld [vmem:[%s192 + $0x14] sm:$0xf]
      %v214 = vld [vmem:[%s192 + $0x18] sm:$0xf]
      %v215 = vld [vmem:[%s192 + $0x1c] sm:$0xf]
      %v216 = vld [vmem:[%s192 + $0x20] sm:$0xf]
      %v217 = vld [vmem:[%s192 + $0x24] sm:$0xf]
      %v218 = vld [vmem:[%s192 + $0x28] sm:$0xf]
      %v219 = vld [vmem:[%s192 + $0x2c] sm:$0xf]
      %v220 = vld [vmem:[%s192 + $0x30] sm:$0xf]
      %v221 = vld [vmem:[%s192 + $0x34] sm:$0xf]
      %v222 = vld [vmem:[%s192 + $0x38] sm:$0xf]
      %v223 = vld [vmem:[%s192 + $0x3c] sm:$0xf]
      %v228 = vunpack.c.l.b16 %v204
      %v229 = vunpack.c.l.b16 %v205
      %v230 = vunpack.c.l.b16 %v206
      %v231 = vunpack.c.l.b16 %v207
      %v232 = vpack.c.b16 %v229, %v228
      %v233 = vpack.c.b16 %v231, %v230
      %v252 = vunpack.c.l.b16 %v208
      %v253 = vunpack.c.l.b16 %v209
      %v254 = vunpack.c.l.b16 %v210
      %v255 = vunpack.c.l.b16 %v211
      %v256 = vunpack.c.l.b16 %v212
      %v257 = vunpack.c.l.b16 %v213
      %v258 = vunpack.c.l.b16 %v214
      %v259 = vunpack.c.l.b16 %v215
      %v260 = vunpack.c.l.b16 %v216
      %v261 = vunpack.c.l.b16 %v217
      %v262 = vunpack.c.l.b16 %v218
      %v263 = vunpack.c.l.b16 %v219
      %v264 = vunpack.c.l.b16 %v220
      %v265 = vunpack.c.l.b16 %v221
      %v266 = vunpack.c.l.b16 %v222
      %v267 = vunpack.c.l.b16 %v223
      %v268 = vpack.c.b16 %v253, %v252
      %v269 = vpack.c.b16 %v255, %v254
      %v270 = vpack.c.b16 %v257, %v256
      %v271 = vpack.c.b16 %v259, %v258
      %v272 = vpack.c.b16 %v261, %v260
      %v273 = vpack.c.b16 %v263, %v262
      %v274 = vpack.c.b16 %v265, %v264
      %v275 = vpack.c.b16 %v267, %v266
      %284 = vmatprep.subr.bf16.mxu0 0
      %285 = vmatpush1.bf16.xpose.msra.mxu0 %v275
      %286 = vmatprep.subr.bf16.mxu0 0
      %287 = vmatpush1.bf16.xpose.msra.mxu0 %v274
      %288 = vmatprep.subr.bf16.mxu0 0
      %289 = vmatpush1.bf16.xpose.msra.mxu0 %v273
      %290 = vmatprep.subr.bf16.mxu0 0
      %291 = vmatpush1.bf16.xpose.msra.mxu0 %v272
      %292 = vmatprep.subr.bf16.mxu0 0
      %293 = vmatpush1.bf16.xpose.msra.mxu0 %v271
      %294 = vmatprep.subr.bf16.mxu0 0
      %295 = vmatpush1.bf16.xpose.msra.mxu0 %v270
      %296 = vmatprep.subr.bf16.mxu0 0
      %297 = vmatpush1.bf16.xpose.msra.mxu0 %v269
      %298 = vmatprep.subr.bf16.mxu0 0
      %299 = vmatpush1.bf16.xpose.msra.mxu0 %v268
      %300 = vmatprep.subr.bf16.mxu0 0
      %301 = vmatpush2.bf16.xpose.msra.mxu0 0
      %302 = vmatprep.subr.bf16.mxu0 0
      %303 = vmatpush2.bf16.xpose.msra.mxu0 0
      %304 = vmatprep.subr.bf16.mxu0 0
      %305 = vmatpush2.bf16.xpose.msra.mxu0 0
      %306 = vmatprep.subr.bf16.mxu0 0
      %307 = vmatpush2.bf16.xpose.msra.mxu0 0
      %308 = vmatprep.subr.bf16.mxu0 0
      %309 = vmatpush2.bf16.xpose.msra.mxu0 0
      %310 = vmatprep.subr.bf16.mxu0 0
      %311 = vmatpush2.bf16.xpose.msra.mxu0 0
      %312 = vmatprep.subr.bf16.mxu0 0
      %313 = vmatpush2.bf16.xpose.msra.mxu0 0
      %314 = vmatprep.subr.bf16.mxu0 0
      %315 = vmatpush2.bf16.xpose.msra.mxu0 0
      %316 = vmatprep.mubr.bf16.mxu0 0
      %317 = vmatmul.mubr.bf16.gmra.mxu0 %v232
      %v318 = vpop.f32.mrf.mxu0
      %v319 = vadd.f32 0.0, %v318
      %v320 = vpop.f32.mrf.mxu0
      %v321 = vpop.f32.mrf.mxu0
      %v322 = vadd.f32 0.0, %v321
      %v323 = vpop.f32.mrf.mxu0
      %324 = vmatprep.mubr.bf16.mxu0 0
      %325 = vmatmul.mubr.bf16.gmra.mxu0 %v233
      %v326 = vpop.f32.mrf.mxu0
      %v327 = vadd.f32 0.0, %v326
      %v328 = vpop.f32.mrf.mxu0
      %v329 = vpop.f32.mrf.mxu0
      %v330 = vadd.f32 0.0, %v329
      %v331 = vpop.f32.mrf.mxu0
      %332 = vdwg.mxu0
      %vm333 = vcmp.ge.f32.partialorder %v319, 0.0
      %vm334 = vcmp.ge.f32.partialorder %v322, 0.0
      %vm335 = vcmp.ge.f32.partialorder %v327, 0.0
      %vm336 = vcmp.ge.f32.partialorder %v330, 0.0
      %v337 = vmul.f32 %v319, 0.01
      %v338 = vmul.f32 %v322, 0.01
      %v339 = vmul.f32 %v327, 0.01
      %v340 = vmul.f32 %v330, 0.01
      %v341 = vsel %vm333, %v319, %v337
      %v342 = vsel %vm334, %v322, %v338
      %v343 = vsel %vm335, %v327, %v339
      %v344 = vsel %vm336, %v330, %v340
      %v345 = vpack.c.bf16 %v342, %v341
      %v346 = vpack.c.bf16 %v344, %v343
      %347 = vmatprep.subr.bf16.mxu0 0
      %348 = vmatpush1.bf16.msra.mxu0 %v275
      %349 = vmatprep.subr.bf16.mxu0 0
      %350 = vmatpush1.bf16.msra.mxu0 %v274
      %351 = vmatprep.subr.bf16.mxu0 0
      %352 = vmatpush1.bf16.msra.mxu0 %v273
      %353 = vmatprep.subr.bf16.mxu0 0
      %354 = vmatpush1.bf16.msra.mxu0 %v272
      %355 = vmatprep.subr.bf16.mxu0 0
      %356 = vmatpush1.bf16.msra.mxu0 %v271
      %357 = vmatprep.subr.bf16.mxu0 0
      %358 = vmatpush1.bf16.msra.mxu0 %v270
      %359 = vmatprep.subr.bf16.mxu0 0
      %360 = vmatpush1.bf16.msra.mxu0 %v269
      %361 = vmatprep.subr.bf16.mxu0 0
      %362 = vmatpush1.bf16.msra.mxu0 %v268
      %363 = vmatprep.subr.bf16.mxu0 0
      %364 = vmatpush2.bf16.msra.mxu0 0
      %365 = vmatprep.subr.bf16.mxu0 0
      %366 = vmatpush2.bf16.msra.mxu0 0
      %367 = vmatprep.subr.bf16.mxu0 0
      %368 = vmatpush2.bf16.msra.mxu0 0
      %369 = vmatprep.subr.bf16.mxu0 0
      %370 = vmatpush2.bf16.msra.mxu0 0
      %371 = vmatprep.subr.bf16.mxu0 0
      %372 = vmatpush2.bf16.msra.mxu0 0
      %373 = vmatprep.subr.bf16.mxu0 0
      %374 = vmatpush2.bf16.msra.mxu0 0
      %375 = vmatprep.subr.bf16.mxu0 0
      %376 = vmatpush2.bf16.msra.mxu0 0
      %377 = vmatprep.subr.bf16.mxu0 0
      %378 = vmatpush2.bf16.msra.mxu0 0
      %379 = vmatprep.mubr.bf16.mxu0 0
      %380 = vmatmul.mubr.bf16.gmra.mxu0 %v345
      %v381 = vpop.f32.mrf.mxu0
      %v382 = vadd.f32 0.0, %v381
      %v383 = vpop.f32.mrf.mxu0
      %v384 = vpop.f32.mrf.mxu0
      %v385 = vadd.f32 0.0, %v384
      %v386 = vpop.f32.mrf.mxu0
      %387 = vmatprep.mubr.bf16.mxu0 0
      %388 = vmatmul.mubr.bf16.gmra.mxu0 %v346
      %v389 = vpop.f32.mrf.mxu0
      %v390 = vadd.f32 0.0, %v389
      %v391 = vpop.f32.mrf.mxu0
      %v392 = vpop.f32.mrf.mxu0
      %v393 = vadd.f32 0.0, %v392
      %v394 = vpop.f32.mrf.mxu0
      %395 = vdwg.mxu0
      %vm396 = vcmp.ge.f32.partialorder %v382, 0.0
      %vm397 = vcmp.ge.f32.partialorder %v385, 0.0
      %vm398 = vcmp.ge.f32.partialorder %v390, 0.0
      %vm399 = vcmp.ge.f32.partialorder %v393, 0.0
      %v400 = vmul.f32 %v382, 0.01
      %v401 = vmul.f32 %v385, 0.01
      %v402 = vmul.f32 %v390, 0.01
      %v403 = vmul.f32 %v393, 0.01
      %v404 = vsel %vm396, %v382, %v400
      %v405 = vsel %vm397, %v385, %v401
      %v406 = vsel %vm398, %v390, %v402
      %v407 = vsel %vm399, %v393, %v403
      %408 = vst [vmem:[%s201] sm:$0xff] %v404
      %409 = vst [vmem:[%s201 + $0x8] sm:$0xff] %v405
      %410 = vst [vmem:[%s201 + $0x10] sm:$0xff] %v406
      %411 = vst [vmem:[%s201 + $0x18] sm:$0xff] %v407
      %s412 = smul.u32 4, %s18
      %p413 = scmp.lt.s32.totalorder %s17, 3
      %s414 = scalar_select %p413, %s17, 3
      %p415 = scmp.lt.s32.totalorder %s412, 3
      %s416 = scalar_select %p415, %s412, 3
      %s417 = smul.addr %s414, 4
      %s418 = sadd.s32 %s416, %s417
      %s419 = smul.addr %s418, 8
      %s420 = scalar_lea.vmem %s2, %s419
      // Predicated region
      $region29: #{hypergraph_forward.1} parent=27 // pred_check
        %p421 = pneg %p99
      $region30: #{hypergraph_forward.1} parent=27 // pred_check_branch
        %423 = sbr.rel (%p421) target = $region32
      $region31: #{hypergraph_forward.1} parent=27 // pred_region
        %s424 = smul.u32 4, %s18
      $region32: #{hypergraph_forward.1} parent=27 // pred_fallthru
        _
    $region28: #{hypergraph_forward.1} parent=5 // pred_fallthru
      _
    %p425 = scmp.le.s32.totalorder 2, %s8
    // Predicated region
    $region33: #{hypergraph_forward.1} parent=5 // pred_check
      %p426 = pneg %p425
    $region34: #{hypergraph_forward.1} parent=5 // pred_check_branch
      %428 = sbr.rel (%p426) target = $region36
    $region35: #{hypergraph_forward.1} parent=5 // pred_region
      %s429 = ssub.s32 %s8, 2
      // Predicated region
      $region37: #{hypergraph_forward.1} parent=35 // pred_check
        %p430 = pneg %p105
      $region38: #{hypergraph_forward.1} parent=35 // pred_check_branch
        %432 = sbr.rel (%p430) target = $region40
      $region39: #{hypergraph_forward.1} parent=35 // pred_region
        %s433 = smul.u32 4, %s20
        %p434 = scmp.lt.s32.totalorder %s19, 3
        %s435 = scalar_select %p434, %s19, 3
        %p436 = scmp.lt.s32.totalorder %s433, 3
        %s437 = scalar_select %p436, %s433, 3
        %s438 = smul.addr %s435, 4
        %s439 = sadd.s32 %s437, %s438
        %s440 = smul.addr %s439, 8
        %s441 = scalar_lea.vmem %s2, %s440
      $region40: #{hypergraph_forward.1} parent=35 // pred_fallthru
        _
    $region36: #{hypergraph_forward.1} parent=5 // pred_fallthru
      _
  $region6: #{hypergraph_forward.1} parent=0 // loop_footer
    %s12 = sadd.s32 1, %s8
  $region7: #{hypergraph_forward.1} parent=0 // loop_footer_branch
    %7 = sbr.rel target = $region3
  $region8: #{hypergraph_forward.1} parent=0 // loop_exit
    _

</llo_original>
